<compile_context>
chip_gen: v7x
topology: tpu7x:2x2x1
jax: 0.10.0
libtpu: 0.0.40
codegen_flags: <defaults>
</compile_context>

<pallas_src>
import functools

import jax
import jax.numpy as jnp
import numpy as np
from jax import lax
from jax.experimental import pallas as pl
from jax.experimental.pallas import tpu as pltpu


def _round_up(x: int, m: int) -> int:
    return ((x + m - 1) // m) * m


def _deglitch_partial_kernel(a_ref, b_ref, wgap_ref, scale_ref, mask_ref, out_ref):
    """Per batch-tile column partial sums of ((a - b) * scale * row_w)^2.

    a, b   : (TB, Npad) lane-dense data slabs (term columns concatenated)
    wgap   : (TB, 1)    per-row gap weight (applies to term-1 columns only)
    scale  : (1, Npad)  1/std per column (0 on padding columns)
    mask   : (1, Npad)  1.0 on term-1 columns, 0.0 elsewhere
    out    : (8, Npad)  partial sums written to sublane 0, zeros elsewhere
    """
    a = a_ref[...].astype(jnp.float32)       # upcast is free in-register (bf16 ok)
    b = b_ref[...].astype(jnp.float32)
    wg = wgap_ref[...].astype(jnp.float32)   # (TB, 1)
    sc = scale_ref[...]                      # (1, Npad)
    m1 = mask_ref[...]                       # (1, Npad)

    # Combined per-element weight: inv_std, times wgap on term-1 columns only.
    w = sc * (m1 * wg + (1.0 - m1))          # (TB, Npad)
    d = (a - b) * w
    d2 = d * d

    npad = d2.shape[1]
    red = jnp.sum(d2, axis=0, keepdims=True)                 # (1, Npad) partial sums
    row = lax.broadcasted_iota(jnp.int32, (8, npad), 0)
    out_ref[...] = jnp.where(row == 0, red, 0.0)             # lane-dense full-tile store


def deglitching_loss(
    phi_nt, phi_nks0, weights_gap, std_nks,
    phi_x0, phi_x_nks0, std_x_nks,
    cross12, cross21, std_cross,
    x_loss_w=1.0, indep_loss_w=1.0,
):
    """Shapes:
       phi_nt, phi_nks0        : (B, N1)
       weights_gap             : (B,) or None
       std_nks                 : (N1,)
       phi_x0, phi_x_nks0      : (B, N2)
       std_x_nks               : (N2,)
       cross12, cross21        : (B, N3)
       std_cross               : (2, N3)
    """
    # TODO(synk): the original module may operate on complex coefficients where
    # |gap|^2 = Re^2 + Im^2; this kernel assumes real-valued inputs.
    B, N1 = phi_nt.shape
    _, N2 = phi_x0.shape
    _, N3 = cross12.shape
    ncat = N1 + N2 + 2 * N3
    npad = _round_up(ncat, 128)

    f32 = jnp.float32
    cdtype = jnp.promote_types(jnp.promote_types(phi_nt.dtype, phi_x0.dtype),
                               cross12.dtype)
    ebytes = np.dtype(cdtype).itemsize

    # ---- batch tile: biggest that fits a conservative VMEM budget ----
    vmem_budget = 12 * 1024 * 1024                 # double-buffered slabs live here
    tb = vmem_budget // (2 * 2 * npad * ebytes)    # 2 slabs x 2 pipeline buffers
    tb = max(8, min(1024, (tb // 8) * 8))
    tb = min(tb, _round_up(B, 8))
    b_pad = _round_up(B, tb)
    nb = b_pad // tb

    # ---- lane-dense slabs: [term1 | term2 | cross12 | cross21 | pad] ----
    slab_a = jnp.concatenate(
        [phi_nt.astype(cdtype), phi_x0.astype(cdtype),
         cross12.astype(cdtype), cross21.astype(cdtype)], axis=1)
    slab_b = jnp.concatenate(
        [phi_nks0.astype(cdtype), phi_x_nks0.astype(cdtype),
         jnp.zeros((B, 2 * N3), cdtype)], axis=1)
    slab_a = jnp.pad(slab_a, ((0, b_pad - B), (0, npad - ncat)))
    slab_b = jnp.pad(slab_b, ((0, b_pad - B), (0, npad - ncat)))

    if weights_gap is None:
        weights_gap = jnp.ones((B,), f32)
    wgap = jnp.pad(weights_gap.astype(f32).reshape(B, 1), ((0, b_pad - B), (0, 0)))

    # ---- pre-inverted std rows folded into one (1, Npad) scale row ----
    inv_std = jnp.concatenate([
        1.0 / std_nks.astype(f32).reshape(N1),
        1.0 / std_x_nks.astype(f32).reshape(N2),
        1.0 / std_cross[0].astype(f32).reshape(N3),
        1.0 / std_cross[1].astype(f32).reshape(N3),
    ])
    scale = jnp.pad(inv_std, (0, npad - ncat)).reshape(1, npad)
    mask1 = jnp.pad(jnp.ones((N1,), f32), (0, npad - N1)).reshape(1, npad)

    grid_spec = pltpu.PrefetchScalarGridSpec(
        num_scalar_prefetch=0,
        grid=(nb,),
        in_specs=[
            pl.BlockSpec((tb, npad), lambda i: (i, 0)),   # slab_a
            pl.BlockSpec((tb, npad), lambda i: (i, 0)),   # slab_b
            pl.BlockSpec((tb, 1), lambda i: (i, 0)),      # gap weights
            pl.BlockSpec((1, npad), lambda i: (0, 0)),    # scale (resident)
            pl.BlockSpec((1, npad), lambda i: (0, 0)),    # term-1 mask (resident)
        ],
        out_specs=pl.BlockSpec((8, npad), lambda i: (i, 0)),
    )

    partials = pl.pallas_call(
        _deglitch_partial_kernel,
        out_shape=jax.ShapeDtypeStruct((nb * 8, npad), jnp.float32),
        grid_spec=grid_spec,
        compiler_params=pltpu.CompilerParams(
            dimension_semantics=("parallel",),      # batch tiles are independent
            vmem_limit_bytes=32 * 1024 * 1024,      # raise v5e's 16 MiB default
        ),
    )(slab_a, slab_b, wgap, scale, mask1)

    # ---- tiny finalize: term means + loss weights (nb*Npad elements) ----
    col = jnp.sum(partials, axis=0)                         # (Npad,)
    loss1 = jnp.sum(col[:N1]) / (B * N1)
    loss2 = jnp.sum(col[N1:N1 + N2]) / (B * N2)
    loss3 = 0.5 * jnp.sum(col[N1 + N2:ncat]) / (B * N3)
    return loss1 + x_loss_w * loss2 + indep_loss_w * loss3


if __name__ == "__main__":
    # Small synthetic shapes consistent with the module's forward.
    B, N1, N2, N3, T = 2, 32, 32, 16, 8
    NTOT = N1 + N2 + 2 * N3

    key = jax.random.PRNGKey(0)
    k = jax.random.split(key, 8)

    # "input" DescribedTensor: y of shape (B, NTOT, T), columns laid out as
    #   [0:N1)            -> deglitch_loss_term = 0   (phi(nt))
    #   [N1:N1+N2)        -> deglitch_loss_term = 1   (phi(x - nt, nt))
    #   [N1+N2:+N3)       -> deglitch_loss_term = 2, nl=0, nr=1 (cross12)
    #   [N1+N2+N3:)       -> deglitch_loss_term = 2, nl=1, nr=0 (cross21)
    input_y = jax.random.normal(k[0], (B, NTOT, T), dtype=jnp.float32)
    phi_nks_y = jax.random.normal(k[1], (B, N1, T), dtype=jnp.float32)   # self.phi_nks.y
    phi_x_y = jax.random.normal(k[2], (B, N2, T), dtype=jnp.float32)     # self.phi_x.y
    std_nks = jnp.abs(jax.random.normal(k[3], (N1,), dtype=jnp.float32)) + 0.5
    std_x_nks = jnp.abs(jax.random.normal(k[4], (N2,), dtype=jnp.float32)) + 0.5
    std_cross = jnp.abs(jax.random.normal(k[5], (2, N3), dtype=jnp.float32)) + 0.5
    weights_gap = jax.random.uniform(k[6], (B,), dtype=jnp.float32) + 0.5
    x_loss_w, indep_loss_w = 1.0, 1.0

    # ---- glue: DescribedTensor.reduce / .select as static slicing, take [:, :, 0] ----
    phi_nt = input_y[:, :N1, 0]                                 # input.reduce(b=0, term=0)
    phi_nks0 = phi_nks_y[:, :, 0]                               # target in compute_gap
    phi_x_nks0 = input_y[:, N1:N1 + N2, 0]                      # input.reduce(term=1)
    phi_x0 = phi_x_y[:, :, 0]
    cross12 = input_y[:, N1 + N2:N1 + N2 + N3, 0]               # select(nl=0, nr=1, term=2)
    cross21 = input_y[:, N1 + N2 + N3:, 0]                      # select(nl=1, nr=0, term=2)
    # TODO(synk): compute_gap's diagnostic stats (max_gap / mean_gap_pct / max_gap_pct,
    # host-side dict side effects keyed by c_type) do not affect the returned loss and
    # are not implemented in the kernel.

    loss_fn = jax.jit(functools.partial(
        deglitching_loss, x_loss_w=x_loss_w, indep_loss_w=indep_loss_w))
    loss = loss_fn(
        phi_nt, phi_nks0, weights_gap, std_nks,
        phi_x0, phi_x_nks0, std_x_nks,
        cross12, cross21, std_cross,
    )
    loss = jax.block_until_ready(loss)

    # ---- pure-JAX reference (mirrors the PyTorch forward) ----
    gap1 = (phi_nt - phi_nks0) * weights_gap[:, None]
    gap1 = gap1 / std_nks[None, :]
    loss1 = jnp.mean(jnp.abs(gap1) ** 2.0)
    gap2 = (phi_x0 - phi_x_nks0) / std_x_nks[None, :]
    loss2 = jnp.mean(jnp.abs(gap2) ** 2.0)
    c12 = cross12 / std_cross[0][None, :]
    c21 = cross21 / std_cross[1][None, :]
    loss3 = 0.5 * (jnp.mean(jnp.abs(c12) ** 2.0) + jnp.mean(jnp.abs(c21) ** 2.0))
    expected = loss1 + x_loss_w * loss2 + indep_loss_w * loss3

    assert jnp.allclose(loss, expected, rtol=1e-4, atol=1e-6), (loss, expected)
    print("KERNEL_OK")
</pallas_src>

<mosaic_0001>
module attributes {stable_mosaic.version = 11 : i64} {
  func.func @_deglitch_partial_kernel(%arg0: i32, %arg1: memref<8x128xf32, #tpu.memory_space<vmem>>, %arg2: memref<8x128xf32, #tpu.memory_space<vmem>>, %arg3: memref<8x1xf32, #tpu.memory_space<vmem>>, %arg4: memref<1x128xf32, #tpu.memory_space<vmem>>, %arg5: memref<1x128xf32, #tpu.memory_space<vmem>>, %arg6: memref<8x128xf32, #tpu.memory_space<vmem>>) attributes {dimension_semantics = [#tpu.dimension_semantics<parallel>], iteration_bounds = array<i64: 1>, scalar_prefetch = 0 : i64, scratch_operands = 0 : i64, tpu.core_type = #tpu.core_type<tc>, window_params = [{transform_indices = @transform_0, window_bounds = array<i64: 8, 128>}, {transform_indices = @transform_1, window_bounds = array<i64: 8, 128>}, {transform_indices = @transform_2, window_bounds = array<i64: 8, 1>}, {pipeline_mode = #tpu.pipeline_mode<synchronous>, transform_indices = @transform_3, window_bounds = array<i64: 1, 128>}, {pipeline_mode = #tpu.pipeline_mode<synchronous>, transform_indices = @transform_4, window_bounds = array<i64: 1, 128>}, {transform_indices = @transform_5, window_bounds = array<i64: 8, 128>}]} {
    %c0 = arith.constant 0 : index
    %c0_0 = arith.constant 0 : index
    %0 = vector.load %arg1[%c0, %c0_0] : memref<8x128xf32, #tpu.memory_space<vmem>>, vector<8x128xf32>
    %c0_1 = arith.constant 0 : index
    %c0_2 = arith.constant 0 : index
    %1 = vector.load %arg2[%c0_1, %c0_2] : memref<8x128xf32, #tpu.memory_space<vmem>>, vector<8x128xf32>
    %c0_3 = arith.constant 0 : index
    %c0_4 = arith.constant 0 : index
    %2 = vector.load %arg3[%c0_3, %c0_4] : memref<8x1xf32, #tpu.memory_space<vmem>>, vector<8x1xf32>
    %c0_5 = arith.constant 0 : index
    %c0_6 = arith.constant 0 : index
    %3 = vector.load %arg4[%c0_5, %c0_6] : memref<1x128xf32, #tpu.memory_space<vmem>>, vector<1x128xf32>
    %c0_7 = arith.constant 0 : index
    %c0_8 = arith.constant 0 : index
    %4 = vector.load %arg5[%c0_7, %c0_8] : memref<1x128xf32, #tpu.memory_space<vmem>>, vector<1x128xf32>
    %5 = vector.broadcast %4 : vector<1x128xf32> to vector<8x128xf32>
    %6 = vector.broadcast %2 : vector<8x1xf32> to vector<8x128xf32>
    %7 = arith.mulf %5, %6 : vector<8x128xf32>
    %cst = arith.constant 1.000000e+00 : f32
    %8 = vector.broadcast %cst : f32 to vector<1x128xf32>
    %9 = arith.subf %8, %4 : vector<1x128xf32>
    %10 = vector.broadcast %9 : vector<1x128xf32> to vector<8x128xf32>
    %11 = arith.addf %7, %10 : vector<8x128xf32>
    %12 = vector.broadcast %3 : vector<1x128xf32> to vector<8x128xf32>
    %13 = arith.mulf %12, %11 : vector<8x128xf32>
    %14 = arith.subf %0, %1 : vector<8x128xf32>
    %15 = arith.mulf %14, %13 : vector<8x128xf32>
    %16 = arith.mulf %15, %15 : vector<8x128xf32>
    %cst_9 = arith.constant dense<0.000000e+00> : vector<128xf32>
    %17 = vector.multi_reduction <add>, %16, %cst_9 [0] : vector<8x128xf32> to vector<128xf32>
    %18 = vector.shape_cast %17 : vector<128xf32> to vector<1x128xf32>
    %19 = tpu.iota {dimensions = array<i32: 0>} : vector<8x128xi32>
    %c0_i32 = arith.constant 0 : i32
    %20 = vector.broadcast %c0_i32 : i32 to vector<8x128xi32>
    %21 = arith.cmpi eq, %19, %20 : vector<8x128xi32>
    %cst_10 = arith.constant 0.000000e+00 : f32
    %22 = vector.shape_cast %18 : vector<1x128xf32> to vector<1x128xf32>
    %23 = vector.broadcast %22 : vector<1x128xf32> to vector<8x128xf32>
    %24 = vector.broadcast %cst_10 : f32 to vector<8x128xf32>
    %25 = arith.select %21, %23, %24 : vector<8x128xi1>, vector<8x128xf32>
    %c0_11 = arith.constant 0 : index
    %c0_12 = arith.constant 0 : index
    %26 = vector.load %arg6[%c0_11, %c0_12] : memref<8x128xf32, #tpu.memory_space<vmem>>, vector<8x128xf32>
    tpu.vector_store %arg6[%c0_11, %c0_12], %25 {strides = array<i32>} : memref<8x128xf32, #tpu.memory_space<vmem>>, vector<8x128xf32>,
    return
  }
  func.func @transform_0(%arg0: i32) -> (i32, i32) {
    %c0_i32 = arith.constant 0 : i32
    %c0_i32_0 = arith.constant 0 : i32
    return %arg0, %c0_i32 : i32, i32
  }
  func.func @transform_1(%arg0: i32) -> (i32, i32) {
    %c0_i32 = arith.constant 0 : i32
    %c0_i32_0 = arith.constant 0 : i32
    return %arg0, %c0_i32 : i32, i32
  }
  func.func @transform_2(%arg0: i32) -> (i32, i32) {
    %c0_i32 = arith.constant 0 : i32
    %c0_i32_0 = arith.constant 0 : i32
    return %arg0, %c0_i32 : i32, i32
  }
  func.func @transform_3(%arg0: i32) -> (i32, i32) {
    %c0_i32 = arith.constant 0 : i32
    %c0_i32_0 = arith.constant 0 : i32
    %c0_i32_1 = arith.constant 0 : i32
    return %c0_i32, %c0_i32_0 : i32, i32
  }
  func.func @transform_4(%arg0: i32) -> (i32, i32) {
    %c0_i32 = arith.constant 0 : i32
    %c0_i32_0 = arith.constant 0 : i32
    %c0_i32_1 = arith.constant 0 : i32
    return %c0_i32, %c0_i32_0 : i32, i32
  }
  func.func @transform_5(%arg0: i32) -> (i32, i32) {
    %c0_i32 = arith.constant 0 : i32
    %c0_i32_0 = arith.constant 0 : i32
    return %arg0, %c0_i32 : i32, i32
  }
}

</mosaic_0001>

<llo_original>
// kernel: deglitching_loss.1
$region0: #{deglitching_loss.1}
  #allocation0 [shape = 'u32[]', space=smem, size = 0x4, offset = 0x4, fixed_abs, tag = 'smem constant byte address 0x4 - core index']
  #allocation1 [shape = 'u32[144,128]{1,0:T(1,128)}', space=vmem, size = 0x12000, scoped, tag = 'internal scratch']
  %s0 = inlined_call_operand.vmem [shape: f32[8,128], index: 0, kind: input, shape index: {}]
  %s1 = inlined_call_operand.vmem [shape: f32[8,128], index: 1, kind: input, shape index: {}]
  %s2 = inlined_call_operand.vmem [shape: f32[8,1], index: 2, kind: input, shape index: {}]
  %s3 = inlined_call_operand.vmem [shape: f32[1,128], index: 3, kind: input, shape index: {}]
  %s4 = inlined_call_operand.vmem [shape: f32[1,128], index: 4, kind: input, shape index: {}]
  %s5 = inlined_call_operand.vmem [shape: f32[8,128], index: 5, kind: output, shape index: {}]
  %s6 = sld [smem:[#allocation0]]
  $region30: #{deglitching_loss.1} parent=0
    _
  %s8 = ssub.s32 1, %s6
  %s9 = scalar_select 0, %s8, %s6
  // Predicated region
  $region2: #{deglitching_loss.1} parent=0 // pred_check
    _
  $region3: #{deglitching_loss.1} parent=0 // pred_check_branch
    %11 = sbr.rel (0) target = $region5
  $region4: #{deglitching_loss.1} parent=0 // pred_region
    _
  $region5: #{deglitching_loss.1} parent=0 // pred_fallthru
    _
  // Predicated region
  $region6: #{deglitching_loss.1} parent=0 // pred_check
    _
  $region7: #{deglitching_loss.1} parent=0 // pred_check_branch
    %13 = sbr.rel (0) target = $region9
  $region8: #{deglitching_loss.1} parent=0 // pred_region
    _
  $region9: #{deglitching_loss.1} parent=0 // pred_fallthru
    _
  // Predicated region
  $region10: #{deglitching_loss.1} parent=0 // pred_check
    _
  $region11: #{deglitching_loss.1} parent=0 // pred_check_branch
    %15 = sbr.rel (0) target = $region13
  $region12: #{deglitching_loss.1} parent=0 // pred_region
    _
  $region13: #{deglitching_loss.1} parent=0 // pred_fallthru
    _
  // Predicated region
  $region14: #{deglitching_loss.1} parent=0 // pred_check
    _
  $region15: #{deglitching_loss.1} parent=0 // pred_check_branch
    %17 = sbr.rel (0) target = $region17
  $region16: #{deglitching_loss.1} parent=0 // pred_region
    _
  $region17: #{deglitching_loss.1} parent=0 // pred_fallthru
    _
  // Predicated region
  $region18: #{deglitching_loss.1} parent=0 // pred_check
    _
  $region19: #{deglitching_loss.1} parent=0 // pred_check_branch
    %19 = sbr.rel (0) target = $region21
  $region20: #{deglitching_loss.1} parent=0 // pred_region
    _
  $region21: #{deglitching_loss.1} parent=0 // pred_fallthru
    _
  %v20 = vld [vmem:[%s0] sm:$0xff]
  %v21 = vld [vmem:[%s1] sm:$0xff]
  %v22 = vld [vmem:[%s2] sm:$0xff]
  %v23 = vld [vmem:[%s3] sm:$0x1]
  %v24 = vld [vmem:[%s4] sm:$0x1]
  %v26 = vlaneseq
  %v27 = vshrl.u32 %v26, 7
  %v28 = vsub.s32 0, %v27
  %v29 = vrot.slane %v24, %v28
  %32 = vset.pattern.permute.xlu0 0
  %33 = vperm.xlu0 %32, %v22
  %v34 = vpop.permute.xlu0 %33
  %v36 = vmul.f32 %v29, %v34
  %v37 = vsub.f32 1.0, %v24
  %v39 = vlaneseq
  %v40 = vshrl.u32 %v39, 7
  %v41 = vsub.s32 0, %v40
  %v42 = vrot.slane %v37, %v41
  %v44 = vadd.f32 %v36, %v42
  %v46 = vlaneseq
  %v47 = vshrl.u32 %v46, 7
  %v48 = vsub.s32 0, %v47
  %v49 = vrot.slane %v23, %v48
  %v51 = vmul.f32 %v49, %v44
  %v52 = vsub.f32 %v20, %v21
  %v53 = vmul.f32 %v52, %v51
  %v54 = vmul.f32 %v53, %v53
  %v55 = vrot.slane %v54, 4
  %v56 = vadd.f32 %v54, %v55
  %v57 = vrot.slane %v56, 2
  %v58 = vadd.f32 %v56, %v57
  %v59 = vrot.slane %v58, 1
  %v60 = vadd.f32 %v58, %v59
  %v61 = vlaneseq
  %v62 = vshrl.u32 %v61, 7
  %vm63 = vcmp.eq.s32.totalorder %v62, 0
  %v64 = vsel %vm63, %v60, 0.0
  %65 = vst [vmem:[%s5] sm:$0xff] %v64
  // Predicated region
  $region22: #{deglitching_loss.1} parent=0 // pred_check
    _
  $region23: #{deglitching_loss.1} parent=0 // pred_check_branch
    %67 = sbr.rel (0) target = $region25
  $region24: #{deglitching_loss.1} parent=0 // pred_region
    _
  $region25: #{deglitching_loss.1} parent=0 // pred_fallthru
    _
  // Predicated region
  $region26: #{deglitching_loss.1} parent=0 // pred_check
    _
  $region27: #{deglitching_loss.1} parent=0 // pred_check_branch
    %69 = sbr.rel (0) target = $region29
  $region28: #{deglitching_loss.1} parent=0 // pred_region
    _
  $region29: #{deglitching_loss.1} parent=0 // pred_fallthru
    _

</llo_original>
